<compile_context>
chip_gen: v7x
topology: tpu7x:2x2x1
jax: 0.10.0
libtpu: 0.0.40
codegen_flags: <defaults>
</compile_context>

<pallas_src>
import functools

import jax
import jax.numpy as jnp
from jax import lax
from jax.experimental import pallas as pl
from jax.experimental.pallas import tpu as pltpu


def _round_up(x, n):
    return ((x + n - 1) // n) * n


def _lora_kernel(x_ref, wa_ref, wb_ref, o_ref):
    # x_ref : (tm, d_pad)      VMEM tile of flattened input rows
    # wa_ref: (d_pad, r_pad)   full Wa = A.weight.T (zero padded)
    # wb_ref: (r_pad, out_pad) full Wb = B.weight.T (zero padded)
    # o_ref : (tm, out_pad)
    xa = jnp.dot(x_ref[...], wa_ref[...], preferred_element_type=jnp.float32)
    # Keep xa in registers (never materialized to scratch); cast back to the
    # activation dtype so the second matmul uses the fast MXU path for bf16.
    xa = xa.astype(x_ref.dtype)
    y = jnp.dot(xa, wb_ref[...], preferred_element_type=jnp.float32)
    o_ref[...] = y.astype(o_ref.dtype)


@functools.partial(jax.jit, static_argnames=("tm", "vmem_limit_bytes"))
def lora_forward(x, wa, wb, *, tm=None, vmem_limit_bytes=64 * 1024 * 1024):
    """x: (batch, seq, d_model); wa: (d_model, rank); wb: (rank, out)."""
    batch, seq, d_model = x.shape
    rank = wa.shape[1]
    out_features = wb.shape[1]
    m = batch * seq

    # ---- lane / sublane alignment -----------------------------------------
    lane = 128
    sub = 8 if x.dtype == jnp.float32 else 16
    d_pad = _round_up(d_model, lane)
    r_pad = _round_up(rank, lane)
    out_pad = _round_up(out_features, lane)

    # ---- row tile -----------------------------------------------------------
    # LoRA is HBM-bandwidth bound (FLOPs ~ 2*m*d*r, tiny for small rank).
    # 512-row tiles double-buffer comfortably within the scoped VMEM limit on
    # v5e (16 MiB default, raised below), v6e and v7x, and keep many grid
    # steps for pipelining / megacore sharding.
    if tm is None:
        tm = min(512, _round_up(m, sub))
    tm = _round_up(tm, sub)
    grid_m = pl.cdiv(m, tm)
    m_pad = grid_m * tm

    # ---- pad to aligned shapes (zero padding is exact) ----------------------
    x2d = jnp.pad(x.reshape(m, d_model), ((0, m_pad - m), (0, d_pad - d_model)))
    wa_p = jnp.pad(wa, ((0, d_pad - d_model), (0, r_pad - rank)))
    wb_p = jnp.pad(wb, ((0, r_pad - rank), (0, out_pad - out_features)))

    x_item = jnp.dtype(x.dtype).itemsize
    w_item = jnp.dtype(wa.dtype).itemsize
    cost = pl.CostEstimate(
        flops=2 * m_pad * d_pad * r_pad + 2 * m_pad * r_pad * out_pad,
        transcendentals=0,
        bytes_accessed=(m_pad * d_pad + m_pad * out_pad) * x_item
        + (d_pad * r_pad + r_pad * out_pad) * w_item,
    )

    y2d = pl.pallas_call(
        _lora_kernel,
        out_shape=jax.ShapeDtypeStruct((m_pad, out_pad), x.dtype),
        grid_spec=pltpu.PrefetchScalarGridSpec(
            num_scalar_prefetch=0,
            grid=(grid_m,),
            in_specs=[
                # Row tile of activations: double-buffered (default) so DMA
                # overlaps compute.
                pl.BlockSpec((tm, d_pad), lambda i: (i, 0)),
                # Weights never change across the grid: single-buffer them to
                # free VMEM for the activation/output tiles.
                pl.BlockSpec((d_pad, r_pad), lambda i: (0, 0),
                             pipeline_mode=pl.Buffered(1)),
                pl.BlockSpec((r_pad, out_pad), lambda i: (0, 0),
                             pipeline_mode=pl.Buffered(1)),
            ],
            out_specs=pl.BlockSpec((tm, out_pad), lambda i: (i, 0)),
        ),
        compiler_params=pltpu.CompilerParams(
            dimension_semantics=("parallel",),
            vmem_limit_bytes=vmem_limit_bytes,
        ),
        cost_estimate=cost,
    )(x2d, wa_p, wb_p)

    return y2d[:m, :out_features].reshape(batch, seq, out_features)


def init_lora_params(key, rank, in_features, out_features, dtype=jnp.float32):
    # Matches the PyTorch __init__:
    #   A.weight ~ Normal(0, 0.02), shape (rank, in_features)
    #   B.weight = 0,               shape (out_features, rank)
    a_w = 0.02 * jax.random.normal(key, (rank, in_features), dtype=dtype)
    b_w = jnp.zeros((out_features, rank), dtype=dtype)
    # Kernel consumes the transposed weights.
    return a_w.T, b_w.T  # Wa: (in, rank), Wb: (rank, out)


if __name__ == "__main__":
    key = jax.random.PRNGKey(0)
    k_x, k_a, k_b = jax.random.split(key, 3)

    batch, seq, d_model = 2, 8, 32
    rank, out_features = 4, 32

    x = jax.random.normal(k_x, (batch, seq, d_model), dtype=jnp.float32)

    # 1) PyTorch-style init (B.weight == 0) -> output must be exactly zero.
    wa0, wb0 = init_lora_params(k_a, rank, d_model, out_features)
    y0 = lora_forward(x, wa0, wb0)
    jax.block_until_ready(y0)
    assert y0.shape == (batch, seq, out_features)
    assert jnp.allclose(y0, 0.0)

    # 2) Non-trivial weights for a real numerical check.
    wa = 0.02 * jax.random.normal(k_a, (d_model, rank), dtype=jnp.float32)
    wb = jax.random.normal(k_b, (rank, out_features), dtype=jnp.float32)
    y = lora_forward(x, wa, wb)
    jax.block_until_ready(y)

    y_ref = jnp.einsum(
        "bsd,dr,ro->bso", x, wa, wb, precision=lax.Precision.HIGHEST
    )
    assert y.shape == (batch, seq, out_features)
    assert jnp.allclose(y, y_ref, atol=1e-3, rtol=1e-3)

    print("KERNEL_OK")
</pallas_src>

<mosaic_0001>
module attributes {stable_mosaic.version = 11 : i64} {
  func.func @_lora_kernel(%arg0: i32, %arg1: memref<16x128xf32, #tpu.memory_space<vmem>>, %arg2: memref<128x128xf32, #tpu.memory_space<vmem>>, %arg3: memref<128x128xf32, #tpu.memory_space<vmem>>, %arg4: memref<16x128xf32, #tpu.memory_space<vmem>>) attributes {dimension_semantics = [#tpu.dimension_semantics<parallel>], iteration_bounds = array<i64: 1>, scalar_prefetch = 0 : i64, scratch_operands = 0 : i64, tpu.core_type = #tpu.core_type<tc>, window_params = [{transform_indices = @transform_0, window_bounds = array<i64: 16, 128>}, {pipeline_mode = #tpu.pipeline_mode<synchronous>, transform_indices = @transform_1, window_bounds = array<i64: 128, 128>}, {pipeline_mode = #tpu.pipeline_mode<synchronous>, transform_indices = @transform_2, window_bounds = array<i64: 128, 128>}, {transform_indices = @transform_3, window_bounds = array<i64: 16, 128>}]} {
    %c0 = arith.constant 0 : index
    %c0_0 = arith.constant 0 : index
    %0 = vector.load %arg1[%c0, %c0_0] : memref<16x128xf32, #tpu.memory_space<vmem>>, vector<16x128xf32>
    %c0_1 = arith.constant 0 : index
    %c0_2 = arith.constant 0 : index
    %1 = vector.load %arg2[%c0_1, %c0_2] : memref<128x128xf32, #tpu.memory_space<vmem>>, vector<128x128xf32>
    %cst = arith.constant dense<0.000000e+00> : vector<16x128xf32>
    %2 = tpu.matmul %0, %1, %cst {dimension_numbers = #tpu.dot_dimension_numbers<[1], [0], [0], [1], [0, 0, 1, 1], [], []>} : vector<16x128xf32>, vector<128x128xf32>, vector<16x128xf32> -> vector<16x128xf32>
    %c0_3 = arith.constant 0 : index
    %c0_4 = arith.constant 0 : index
    %3 = vector.load %arg3[%c0_3, %c0_4] : memref<128x128xf32, #tpu.memory_space<vmem>>, vector<128x128xf32>
    %cst_5 = arith.constant dense<0.000000e+00> : vector<16x128xf32>
    %4 = tpu.matmul %2, %3, %cst_5 {dimension_numbers = #tpu.dot_dimension_numbers<[1], [0], [0], [1], [0, 0, 1, 1], [], []>} : vector<16x128xf32>, vector<128x128xf32>, vector<16x128xf32> -> vector<16x128xf32>
    %c0_6 = arith.constant 0 : index
    %c0_7 = arith.constant 0 : index
    %5 = vector.load %arg4[%c0_6, %c0_7] : memref<16x128xf32, #tpu.memory_space<vmem>>, vector<16x128xf32>
    tpu.vector_store %arg4[%c0_6, %c0_7], %4 {strides = array<i32>} : memref<16x128xf32, #tpu.memory_space<vmem>>, vector<16x128xf32>,
    return
  }
  func.func @transform_0(%arg0: i32) -> (i32, i32) {
    %c0_i32 = arith.constant 0 : i32
    %c0_i32_0 = arith.constant 0 : i32
    return %arg0, %c0_i32 : i32, i32
  }
  func.func @transform_1(%arg0: i32) -> (i32, i32) {
    %c0_i32 = arith.constant 0 : i32
    %c0_i32_0 = arith.constant 0 : i32
    %c0_i32_1 = arith.constant 0 : i32
    return %c0_i32, %c0_i32_0 : i32, i32
  }
  func.func @transform_2(%arg0: i32) -> (i32, i32) {
    %c0_i32 = arith.constant 0 : i32
    %c0_i32_0 = arith.constant 0 : i32
    %c0_i32_1 = arith.constant 0 : i32
    return %c0_i32, %c0_i32_0 : i32, i32
  }
  func.func @transform_3(%arg0: i32) -> (i32, i32) {
    %c0_i32 = arith.constant 0 : i32
    %c0_i32_0 = arith.constant 0 : i32
    return %arg0, %c0_i32 : i32, i32
  }
}

</mosaic_0001>

<llo_original>
// kernel: lora_forward.1
$region0: #{lora_forward.1}
  #allocation0 [shape = 'u32[]', space=smem, size = 0x4, offset = 0x4, fixed_abs, tag = 'smem constant byte address 0x4 - core index']
  #allocation1 [shape = 'u32[144,128]{1,0:T(1,128)}', space=vmem, size = 0x12000, scoped, tag = 'internal scratch']
  %s0 = inlined_call_operand.hbm [shape: f32[16,128], index: 0, kind: input, shape index: {}]
  %s1 = inlined_call_operand.hbm [shape: f32[128,128], index: 1, kind: input, shape index: {}]
  %s2 = inlined_call_operand.hbm [shape: f32[128,128], index: 2, kind: input, shape index: {}]
  %s3 = inlined_call_operand.hbm [shape: f32[16,128], index: 3, kind: output, shape index: {}]
  %s4 = sld [smem:[#allocation0]]
  $region34: #{lora_forward.1} parent=0
    _
  %s6 = ssub.s32 1, %s4
  %s7 = scalar_select 0, %s6, %s4
  $region1: #{lora_forward.1} parent=0
    #allocation2 [shape = 'u8[8192]{0}', space=vmem, size = 0x2000, scoped, tag = 'input window, operand 0, single buffered']
    #allocation3 [shape = 's32[1]{0}', space=sflag, size = 0x4, scoped, tag = 'scoped memory for lora_forward.1']
    #allocation4 [shape = 's32[1]{0}', space=sflag, size = 0x4, scoped, tag = 'scoped memory for lora_forward.1']
    #allocation5 [shape = 'u8[65536]{0}', space=vmem, size = 0x10000, scoped, tag = 'input window, operand 1, single buffered']
    #allocation6 [shape = 's32[1]{0}', space=sflag, size = 0x4, scoped, tag = 'scoped memory for lora_forward.1']
    #allocation7 [shape = 'u8[65536]{0}', space=vmem, size = 0x10000, scoped, tag = 'input window, operand 2, single buffered']
    #allocation8 [shape = 'u8[8192]{0}', space=vmem, size = 0x2000, scoped, tag = 'output window, operand 0, single buffered']
    %8 = vsyncpa [#allocation3], 0
    %9 = vsyncpa [#allocation6], 0
    %10 = vsyncpa [#allocation4], 0
    // Predicated region
    $region2: #{lora_forward.1} parent=1 // pred_check
      _
    $region3: #{lora_forward.1} parent=1 // pred_check_branch
      %12 = sbr.rel (0) target = $region5
    $region4: #{lora_forward.1} parent=1 // pred_region
      %s14 = ssub.s32 256, 256
      %15 = vsyncadd [#allocation3], %s14
      %s16 = sshll.u32 [#allocation2], 4
      %s17 = int_to_ptr.vmem [resolvable:$true] %s16
      %22 = dma.hbm_to_vmem [thread:$0]  %s0, 256, %s17, [#allocation3], 128, 128, 8
    $region5: #{lora_forward.1} parent=1 // pred_fallthru
      _
    // Predicated region
    $region6: #{lora_forward.1} parent=1 // pred_check
      _
    $region7: #{lora_forward.1} parent=1 // pred_check_branch
      %24 = sbr.rel (0) target = $region9
    $region8: #{lora_forward.1} parent=1 // pred_region
      %s26 = ssub.s32 2048, 2048
      %27 = vsyncadd [#allocation6], %s26
      %s28 = sshll.u32 [#allocation5], 4
      %s29 = int_to_ptr.vmem [resolvable:$true] %s28
      %34 = dma.hbm_to_vmem [thread:$0]  %s1, 2048, %s29, [#allocation6], 128, 128, 8
    $region9: #{lora_forward.1} parent=1 // pred_fallthru
      _
    // Predicated region
    $region10: #{lora_forward.1} parent=1 // pred_check
      _
    $region11: #{lora_forward.1} parent=1 // pred_check_branch
      %36 = sbr.rel (0) target = $region13
    $region12: #{lora_forward.1} parent=1 // pred_region
      %s38 = ssub.s32 2048, 2048
      %39 = vsyncadd [#allocation6], %s38
      %s40 = sshll.u32 [#allocation7], 4
      %s41 = int_to_ptr.vmem [resolvable:$true] %s40
      %46 = dma.hbm_to_vmem [thread:$0]  %s2, 2048, %s41, [#allocation6], 128, 128, 8
    $region13: #{lora_forward.1} parent=1 // pred_fallthru
      _
    // Predicated region
    $region14: #{lora_forward.1} parent=1 // pred_check
      _
    $region15: #{lora_forward.1} parent=1 // pred_check_branch
      %48 = sbr.rel (0) target = $region17
    $region16: #{lora_forward.1} parent=1 // pred_region
      %49 = dma.done [#allocation3], 256
    $region17: #{lora_forward.1} parent=1 // pred_fallthru
      _
    // Predicated region
    $region18: #{lora_forward.1} parent=1 // pred_check
      _
    $region19: #{lora_forward.1} parent=1 // pred_check_branch
      %51 = sbr.rel (0) target = $region21
    $region20: #{lora_forward.1} parent=1 // pred_region
      %52 = dma.done [#allocation6], 2048
    $region21: #{lora_forward.1} parent=1 // pred_fallthru
      _
    // Predicated region
    $region22: #{lora_forward.1} parent=1 // pred_check
      _
    $region23: #{lora_forward.1} parent=1 // pred_check_branch
      %54 = sbr.rel (0) target = $region25
    $region24: #{lora_forward.1} parent=1 // pred_region
      %55 = dma.done [#allocation6], 2048
    $region25: #{lora_forward.1} parent=1 // pred_fallthru
      _
    %v56 = vld [vmem:[#allocation2] sm:$0xff]
    %v57 = vld [vmem:[#allocation2 + $0x8] sm:$0xff]
    %v58 = vld [vmem:[#allocation5] sm:$0xff]
    %v59 = vld [vmem:[#allocation5 + $0x8] sm:$0xff]
    %v60 = vld [vmem:[#allocation5 + $0x10] sm:$0xff]
    %v61 = vld [vmem:[#allocation5 + $0x18] sm:$0xff]
    %v62 = vld [vmem:[#allocation5 + $0x20] sm:$0xff]
    %v63 = vld [vmem:[#allocation5 + $0x28] sm:$0xff]
    %v64 = vld [vmem:[#allocation5 + $0x30] sm:$0xff]
    %v65 = vld [vmem:[#allocation5 + $0x38] sm:$0xff]
    %v66 = vld [vmem:[#allocation5 + $0x40] sm:$0xff]
    %v67 = vld [vmem:[#allocation5 + $0x48] sm:$0xff]
    %v68 = vld [vmem:[#allocation5 + $0x50] sm:$0xff]
    %v69 = vld [vmem:[#allocation5 + $0x58] sm:$0xff]
    %v70 = vld [vmem:[#allocation5 + $0x60] sm:$0xff]
    %v71 = vld [vmem:[#allocation5 + $0x68] sm:$0xff]
    %v72 = vld [vmem:[#allocation5 + $0x70] sm:$0xff]
    %v73 = vld [vmem:[#allocation5 + $0x78] sm:$0xff]
    %74 = vmatprep.subr.mxu0 0.0
    %75 = vmatpush1.msra.mxu0 %v58
    %76 = vmatprep.subr.mxu0 0.0
    %77 = vmatpush1.msra.mxu0 %v59
    %78 = vmatprep.subr.mxu0 0.0
    %79 = vmatpush1.msra.mxu0 %v60
    %80 = vmatprep.subr.mxu0 0.0
    %81 = vmatpush1.msra.mxu0 %v61
    %82 = vmatprep.subr.mxu0 0.0
    %83 = vmatpush1.msra.mxu0 %v62
    %84 = vmatprep.subr.mxu0 0.0
    %85 = vmatpush1.msra.mxu0 %v63
    %86 = vmatprep.subr.mxu0 0.0
    %87 = vmatpush1.msra.mxu0 %v64
    %88 = vmatprep.subr.mxu0 0.0
    %89 = vmatpush1.msra.mxu0 %v65
    %90 = vmatprep.subr.mxu0 0.0
    %91 = vmatpush1.msra.mxu0 %v66
    %92 = vmatprep.subr.mxu0 0.0
    %93 = vmatpush1.msra.mxu0 %v67
    %94 = vmatprep.subr.mxu0 0.0
    %95 = vmatpush1.msra.mxu0 %v68
    %96 = vmatprep.subr.mxu0 0.0
    %97 = vmatpush1.msra.mxu0 %v69
    %98 = vmatprep.subr.mxu0 0.0
    %99 = vmatpush1.msra.mxu0 %v70
    %100 = vmatprep.subr.mxu0 0.0
    %101 = vmatpush1.msra.mxu0 %v71
    %102 = vmatprep.subr.mxu0 0.0
    %103 = vmatpush1.msra.mxu0 %v72
    %104 = vmatprep.subr.mxu0 0.0
    %105 = vmatpush1.msra.mxu0 %v73
    %106 = vmatprep.subr.mxu0 0.0
    %107 = vmatpush1.msra.mxu0 0.0
    %108 = vmatprep.subr.mxu0 0.0
    %109 = vmatpush1.msra.mxu0 0.0
    %110 = vmatprep.subr.mxu0 0.0
    %111 = vmatpush1.msra.mxu0 0.0
    %112 = vmatprep.subr.mxu0 0.0
    %113 = vmatpush1.msra.mxu0 0.0
    %114 = vmatprep.subr.mxu0 0.0
    %115 = vmatpush1.msra.mxu0 0.0
    %116 = vmatprep.subr.mxu0 0.0
    %117 = vmatpush1.msra.mxu0 0.0
    %118 = vmatprep.subr.mxu0 0.0
    %119 = vmatpush1.msra.mxu0 0.0
    %120 = vmatprep.subr.mxu0 0.0
    %121 = vmatpush1.msra.mxu0 0.0
    %122 = vmatprep.subr.mxu0 0.0
    %123 = vmatpush1.msra.mxu0 0.0
    %124 = vmatprep.subr.mxu0 0.0
    %125 = vmatpush1.msra.mxu0 0.0
    %126 = vmatprep.subr.mxu0 0.0
    %127 = vmatpush1.msra.mxu0 0.0
    %128 = vmatprep.subr.mxu0 0.0
    %129 = vmatpush1.msra.mxu0 0.0
    %130 = vmatprep.subr.mxu0 0.0
    %131 = vmatpush1.msra.mxu0 0.0
    %132 = vmatprep.subr.mxu0 0.0
    %133 = vmatpush1.msra.mxu0 0.0
    %134 = vmatprep.subr.mxu0 0.0
    %135 = vmatpush1.msra.mxu0 0.0
    %136 = vmatprep.subr.mxu0 0.0
    %137 = vmatpush1.msra.mxu0 0.0
    %138 = vmatprep.mubr.f32.mxu0 0.0
    %139 = vmatmul.mubr.f32.gmra.mrb[0].mxu0 %v56
    %v140 = vpop.f32.mrb[0].mxu0
    %v141 = vadd.f32 0.0, %v140
    %v142 = vpop.f32.mrb[0].mxu0
    %143 = vmatprep.mubr.f32.mxu0 0.0
    %144 = vmatmul.mubr.f32.gmra.mrb[0].mxu0 %v57
    %v145 = vpop.f32.mrb[0].mxu0
    %v146 = vadd.f32 0.0, %v145
    %v147 = vpop.f32.mrb[0].mxu0
    %148 = vdwg.mxu0
    %v149 = vld [vmem:[#allocation7] sm:$0xff]
    %v150 = vld [vmem:[#allocation7 + $0x8] sm:$0xff]
    %v151 = vld [vmem:[#allocation7 + $0x10] sm:$0xff]
    %v152 = vld [vmem:[#allocation7 + $0x18] sm:$0xff]
    %v153 = vld [vmem:[#allocation7 + $0x20] sm:$0xff]
    %v154 = vld [vmem:[#allocation7 + $0x28] sm:$0xff]
    %v155 = vld [vmem:[#allocation7 + $0x30] sm:$0xff]
    %v156 = vld [vmem:[#allocation7 + $0x38] sm:$0xff]
    %v157 = vld [vmem:[#allocation7 + $0x40] sm:$0xff]
    %v158 = vld [vmem:[#allocation7 + $0x48] sm:$0xff]
    %v159 = vld [vmem:[#allocation7 + $0x50] sm:$0xff]
    %v160 = vld [vmem:[#allocation7 + $0x58] sm:$0xff]
    %v161 = vld [vmem:[#allocation7 + $0x60] sm:$0xff]
    %v162 = vld [vmem:[#allocation7 + $0x68] sm:$0xff]
    %v163 = vld [vmem:[#allocation7 + $0x70] sm:$0xff]
    %v164 = vld [vmem:[#allocation7 + $0x78] sm:$0xff]
    %165 = vmatprep.subr.mxu0 0.0
    %166 = vmatpush1.msra.mxu0 %v149
    %167 = vmatprep.subr.mxu0 0.0
    %168 = vmatpush1.msra.mxu0 %v150
    %169 = vmatprep.subr.mxu0 0.0
    %170 = vmatpush1.msra.mxu0 %v151
    %171 = vmatprep.subr.mxu0 0.0
    %172 = vmatpush1.msra.mxu0 %v152
    %173 = vmatprep.subr.mxu0 0.0
    %174 = vmatpush1.msra.mxu0 %v153
    %175 = vmatprep.subr.mxu0 0.0
    %176 = vmatpush1.msra.mxu0 %v154
    %177 = vmatprep.subr.mxu0 0.0
    %178 = vmatpush1.msra.mxu0 %v155
    %179 = vmatprep.subr.mxu0 0.0
    %180 = vmatpush1.msra.mxu0 %v156
    %181 = vmatprep.subr.mxu0 0.0
    %182 = vmatpush1.msra.mxu0 %v157
    %183 = vmatprep.subr.mxu0 0.0
    %184 = vmatpush1.msra.mxu0 %v158
    %185 = vmatprep.subr.mxu0 0.0
    %186 = vmatpush1.msra.mxu0 %v159
    %187 = vmatprep.subr.mxu0 0.0
    %188 = vmatpush1.msra.mxu0 %v160
    %189 = vmatprep.subr.mxu0 0.0
    %190 = vmatpush1.msra.mxu0 %v161
    %191 = vmatprep.subr.mxu0 0.0
    %192 = vmatpush1.msra.mxu0 %v162
    %193 = vmatprep.subr.mxu0 0.0
    %194 = vmatpush1.msra.mxu0 %v163
    %195 = vmatprep.subr.mxu0 0.0
    %196 = vmatpush1.msra.mxu0 %v164
    %197 = vmatprep.subr.mxu0 0.0
    %198 = vmatpush1.msra.mxu0 0.0
    %199 = vmatprep.subr.mxu0 0.0
    %200 = vmatpush1.msra.mxu0 0.0
    %201 = vmatprep.subr.mxu0 0.0
    %202 = vmatpush1.msra.mxu0 0.0
    %203 = vmatprep.subr.mxu0 0.0
    %204 = vmatpush1.msra.mxu0 0.0
    %205 = vmatprep.subr.mxu0 0.0
    %206 = vmatpush1.msra.mxu0 0.0
    %207 = vmatprep.subr.mxu0 0.0
    %208 = vmatpush1.msra.mxu0 0.0
    %209 = vmatprep.subr.mxu0 0.0
    %210 = vmatpush1.msra.mxu0 0.0
    %211 = vmatprep.subr.mxu0 0.0
    %212 = vmatpush1.msra.mxu0 0.0
    %213 = vmatprep.subr.mxu0 0.0
    %214 = vmatpush1.msra.mxu0 0.0
    %215 = vmatprep.subr.mxu0 0.0
    %216 = vmatpush1.msra.mxu0 0.0
    %217 = vmatprep.subr.mxu0 0.0
    %218 = vmatpush1.msra.mxu0 0.0
    %219 = vmatprep.subr.mxu0 0.0
    %220 = vmatpush1.msra.mxu0 0.0
    %221 = vmatprep.subr.mxu0 0.0
    %222 = vmatpush1.msra.mxu0 0.0
    %223 = vmatprep.subr.mxu0 0.0
    %224 = vmatpush1.msra.mxu0 0.0
    %225 = vmatprep.subr.mxu0 0.0
    %226 = vmatpush1.msra.mxu0 0.0
    %227 = vmatprep.subr.mxu0 0.0
    %228 = vmatpush1.msra.mxu0 0.0
    %229 = vmatprep.mubr.f32.mxu0 0.0
    %230 = vmatmul.mubr.f32.gmra.mrb[0].mxu0 %v141
    %v231 = vpop.f32.mrb[0].mxu0
    %v232 = vadd.f32 0.0, %v231
    %v233 = vpop.f32.mrb[0].mxu0
    %234 = vmatprep.mubr.f32.mxu0 0.0
    %235 = vmatmul.mubr.f32.gmra.mrb[0].mxu0 %v146
    %v236 = vpop.f32.mrb[0].mxu0
    %v237 = vadd.f32 0.0, %v236
    %v238 = vpop.f32.mrb[0].mxu0
    %239 = vdwg.mxu0
    %240 = vst [vmem:[#allocation8] sm:$0xff] %v232
    %241 = vst [vmem:[#allocation8 + $0x8] sm:$0xff] %v237
    // Predicated region
    $region26: #{lora_forward.1} parent=1 // pred_check
      _
    $region27: #{lora_forward.1} parent=1 // pred_check_branch
      %243 = sbr.rel (0) target = $region29
    $region28: #{lora_forward.1} parent=1 // pred_region
      %s245 = ssub.s32 256, 256
      %246 = vsyncadd [#allocation4], %s245
      %s247 = sshll.u32 [#allocation8], 4
      %s248 = int_to_ptr.vmem [resolvable:$true] %s247
      %253 = dma.vmem_to_hbm [thread:$0]  %s248, 256, %s3, [#allocation4], 128, 128, 8
    $region29: #{lora_forward.1} parent=1 // pred_fallthru
      _
    // Predicated region
    $region30: #{lora_forward.1} parent=1 // pred_check
      _
    $region31: #{lora_forward.1} parent=1 // pred_check_branch
      %255 = sbr.rel (0) target = $region33
    $region32: #{lora_forward.1} parent=1 // pred_region
      %256 = dma.done [#allocation4], 256
    $region33: #{lora_forward.1} parent=1 // pred_fallthru
      _
    %257 = vsyncpa [#allocation3], 1
    %258 = vsyncpa [#allocation6], 1
    %259 = vsyncpa [#allocation4], 1

</llo_original>
